<compile_context>
chip_gen: v7x
topology: tpu7x:2x2x1
jax: 0.10.0
libtpu: 0.0.40
codegen_flags: <defaults>
</compile_context>

<pallas_src>
import numpy as np
import jax
import jax.numpy as jnp
from jax import lax
from jax.experimental import pallas as pl
from jax.experimental.pallas import tpu as pltpu

LEAKY_SLOPE = 0.01   # nn.LeakyReLU() default
BN_EPS = 1e-5        # nn.BatchNorm2d default


# ----------------------- weight-derived constant builders -----------------------

def _band_matrix(wk, w_in, stride, pad):
    """wk: (kw, Ci, Co) one kernel row -> horizontal band (w_in*Ci, w_out*Co)."""
    kw, ci, co = wk.shape
    w_out = (w_in + 2 * pad - kw) // stride + 1
    band = np.zeros((w_in * ci, w_out * co), np.float32)
    for wo in range(w_out):
        for kx in range(kw):
            wi = stride * wo + kx - pad
            if 0 <= wi < w_in:
                band[wi * ci:(wi + 1) * ci, wo * co:(wo + 1) * co] = wk[kx]
    return band


def _stacked_band_conv(w_oihw, W, stride, pad, two_row_output):
    """Stacked band matrix for the row-pair-folded slab layout.

    The expanded slab for output slab row p=(n, r) holds 6 image-row chunks
    (image rows 2r-2 .. 2r+3), each W*Ci lanes wide.
      two_row_output=True  (conv 3x3 s1): output chunks j=0,1 = image rows 2r, 2r+1
                                          -> kernel row dh = i - j - 1
      two_row_output=False (conv 4x4 s2): single output chunk = output row ho=r
                                          -> kernel row dh = i - 1
    """
    ci, kh = w_oihw.shape[1], w_oihw.shape[2]
    w = np.transpose(np.asarray(w_oihw, np.float32), (2, 3, 1, 0))   # (kh,kw,Ci,Co)
    bands = [_band_matrix(w[dh], W, stride, pad) for dh in range(kh)]
    wc_in = W * ci
    wc_out = bands[0].shape[1]
    n_out = 2 if two_row_output else 1
    C = np.zeros((6 * wc_in, n_out * wc_out), np.float32)
    for i in range(6):
        for j in range(n_out):
            dh = (i - j - 1) if two_row_output else (i - 1)
            if 0 <= dh < kh:
                C[i * wc_in:(i + 1) * wc_in, j * wc_out:(j + 1) * wc_out] = bands[dh]
    return C


def prepare_block_constants(params, N, H, W):
    """Build all weight-derived kernel operands ONCE (hoisted out of per-call jit)."""
    Ch, Cin = params["conv1_w"].shape[:2]
    Co = params["conv2_w"].shape[0]
    assert Ch == Cin, "packed operand slabs assume hidden_nc == input_nc (module default)"
    Wo = W // 2
    Lx, Lh = 2 * W * Cin, 2 * W * Ch
    Ly, Lo = Wo * Co, N * Wo * Co
    Lmax = max(Lx, Lh, Lo)

    p = {k: np.asarray(v, np.float32) for k, v in params.items()}

    # packed bf16 MXU weight slab: [conv1 stacked band | conv2 stacked band | bypass]
    C1 = _stacked_band_conv(p["conv1_w"], W, 1, 1, two_row_output=True)    # (3Lx, Lh)
    C2 = _stacked_band_conv(p["conv2_w"], W, 2, 1, two_row_output=False)   # (3Lh, Ly)
    CBf = np.kron(np.eye(N * Wo, dtype=np.float32),
                  p["bypass_w"][:, :, 0, 0].T)                             # (N*Wo*Cin, Lo)
    wrows = 3 * Lx + 3 * Lh + N * Wo * Cin
    wpack = np.zeros((wrows, Lmax), np.float32)
    wpack[0:3 * Lx, 0:Lh] = C1
    wpack[3 * Lx:3 * (Lx + Lh), 0:Ly] = C2
    wpack[3 * (Lx + Lh):, 0:Lo] = CBf

    # packed per-lane vectors: BN affine params (pre-broadcast to lanes) + biases
    vecs = np.zeros((8, Lmax), np.float32)
    vecs[0, 0:Lx] = np.tile(p["bn1_gamma"], 2 * W)
    vecs[1, 0:Lx] = np.tile(p["bn1_beta"], 2 * W)
    vecs[2, 0:Lh] = np.tile(p["bn2_gamma"], 2 * W)
    vecs[3, 0:Lh] = np.tile(p["bn2_beta"], 2 * W)
    vecs[4, 0:Lh] = np.tile(p["conv1_b"], 2 * W)
    vecs[5, 0:Lo] = np.tile(p["conv2_b"] + p["bypass_b"], N * Wo)

    # channel-mean projection matrices (1/count folded in) for the two BatchNorms
    cnt = np.float32(N * H * W)
    P1 = np.kron(np.ones((2 * W, 2 * W), np.float32), np.eye(Cin, dtype=np.float32)) / cnt
    P2 = np.kron(np.ones((2 * W, 2 * W), np.float32), np.eye(Ch, dtype=np.float32)) / cnt
    pmat = np.stack([P1, P2])                                              # (2, Lx, Lx)

    return dict(wpack=jnp.asarray(wpack, jnp.bfloat16),
                vecs=jnp.asarray(vecs, jnp.float32),
                pmat=jnp.asarray(pmat, jnp.float32))


# --------------------------------- Pallas kernel ---------------------------------

def _make_kernel(N, H, W, Cin, Ch, Co):
    R = H // 2              # slab rows per image (two image rows folded per slab row)
    NR = N * R
    Wo = W // 2
    Lx = 2 * W * Cin        # x / h1 lane width
    Lh = 2 * W * Ch         # y1 / h2 lane width
    Ly = Wo * Co            # conv2 output lanes per image row
    Lo = N * Wo * Co        # folded (batch-along-lanes) output width
    NWoCin = N * Wo * Cin
    f32, bf16 = jnp.float32, jnp.bfloat16

    def kernel(x_ref, xp_ref, vec_ref, p_ref, w_ref, out_ref):
        vecs = vec_ref[...]

        # Row-pair validity masks: kill image top/bottom padding and the
        # inter-image wrap introduced by the rolls.
        rr = lax.broadcasted_iota(jnp.int32, (NR, 1), 0) % R
        m_prev = (rr != 0).astype(f32)
        m_next = (rr != R - 1).astype(f32)

        def bn_lrelu(v, pmat, gamma_l, beta_l):
            # one-pass batch stats; pmat folds 1/count and broadcasts channel
            # stats straight back to the lane layout in a single tiny matmul.
            sums = jnp.concatenate(
                [jnp.sum(v, axis=0, keepdims=True),
                 jnp.sum(v * v, axis=0, keepdims=True)], axis=0)          # (2, L)
            stats = jnp.dot(sums, pmat, preferred_element_type=f32)       # (2, L)
            mean_l = stats[0:1, :]
            var_l = stats[1:2, :] - mean_l * mean_l
            scale_l = gamma_l * lax.rsqrt(var_l + BN_EPS)                 # EUP rsqrt
            y = (v - mean_l) * scale_l + beta_l
            return jnp.maximum(y, LEAKY_SLOPE * y)                        # LeakyReLU

        def expand_rows(h):
            # (NR, L) -> (NR, 3L): [row-pair p-1 | row-pair p | row-pair p+1],
            # cast to bf16 for the MXU (accumulation stays f32).
            prev = jnp.roll(h, 1, axis=0) * m_prev
            nxt = jnp.roll(h, -1, axis=0) * m_next
            return jnp.concatenate([prev, h, nxt], axis=1).astype(bf16)

        # ---------------- main branch ----------------
        x = x_ref[...]
        h1 = bn_lrelu(x, p_ref[0], vecs[0:1, 0:Lx], vecs[1:2, 0:Lx])
        y1 = jnp.dot(expand_rows(h1), w_ref[0:3 * Lx, 0:Lh],
                     preferred_element_type=f32) + vecs[4:5, 0:Lh]        # Conv3x3 s1 p1
        h2 = bn_lrelu(y1, p_ref[1], vecs[2:3, 0:Lh], vecs[3:4, 0:Lh])
        y2 = jnp.dot(expand_rows(h2), w_ref[3 * Lx:3 * (Lx + Lh), 0:Ly],
                     preferred_element_type=f32)                          # Conv4x4 s2 p1
        # fold batch along lanes -> (R, N*Wo*Co): 128-lane-dense output slab
        y2f = jnp.concatenate([y2[i * R:(i + 1) * R, :] for i in range(N)], axis=1)

        # ---------------- shortcut: (AvgPool2x2 done in prologue) -> Conv1x1 ----------------
        sc = jnp.dot(xp_ref[...].astype(bf16),
                     w_ref[3 * (Lx + Lh):3 * (Lx + Lh) + NWoCin, 0:Lo],
                     preferred_element_type=f32)

        out_ref[...] = y2f + sc + vecs[5:6, 0:Lo]     # conv2 bias + bypass bias fused

    return kernel


def _full_spec(shape):
    nd = len(shape)
    return pl.BlockSpec(shape, lambda i, _nd=nd: (0,) * _nd)


# ------------------------------------ wrapper ------------------------------------

def make_res_encoder_forward(N, Cin, H, W, Ch, Co):
    R, Ho, Wo = H // 2, H // 2, W // 2
    Lo = N * Wo * Co
    kernel = _make_kernel(N, H, W, Cin, Ch, Co)

    @jax.jit
    def forward(x_nchw, wpack, vecs, pmat):
        x_nhwc = jnp.transpose(x_nchw, (0, 2, 3, 1)).astype(jnp.float32)   # (N,H,W,C)
        # activations: two consecutive image rows per slab row -> 128 lanes
        x_slab = x_nhwc.reshape(N * R, 2 * W * Cin)
        # shortcut prologue: 2x2 avg-pool, batch folded along lanes
        pooled = x_nhwc.reshape(N, Ho, 2, Wo, 2, Cin).mean(axis=(2, 4))
        xp_slab = jnp.transpose(pooled, (1, 0, 2, 3)).reshape(Ho, N * Wo * Cin)

        operands = (x_slab, xp_slab, vecs, pmat, wpack)
        out_folded = pl.pallas_call(
            kernel,
            out_shape=jax.ShapeDtypeStruct((Ho, Lo), jnp.float32),
            grid=(1,),
            in_specs=[_full_spec(o.shape) for o in operands],
            out_specs=_full_spec((Ho, Lo)),
            compiler_params=pltpu.CompilerParams(
                dimension_semantics=("arbitrary",)),
        )(*operands)

        out = out_folded.reshape(Ho, N, Wo, Co)
        return jnp.transpose(out, (1, 3, 0, 2))                 # -> (N, Co, Ho, Wo)

    return forward


# ------------------------------ pure-JAX reference ------------------------------

def reference_forward(x_nchw, params):
    def bn(x, gamma, beta):
        mean = x.mean(axis=(0, 2, 3), keepdims=True)
        var = x.var(axis=(0, 2, 3), keepdims=True)
        return (gamma[None, :, None, None] * (x - mean)
                / jnp.sqrt(var + BN_EPS) + beta[None, :, None, None])

    def lrelu(x):
        return jnp.where(x >= 0, x, LEAKY_SLOPE * x)

    def conv(x, w, b, stride, pad):
        y = lax.conv_general_dilated(
            x, w, (stride, stride), [(pad, pad), (pad, pad)],
            dimension_numbers=("NCHW", "OIHW", "NCHW"))
        return y + b[None, :, None, None]

    h = conv(lrelu(bn(x_nchw, params["bn1_gamma"], params["bn1_beta"])),
             params["conv1_w"], params["conv1_b"], 1, 1)
    h = conv(lrelu(bn(h, params["bn2_gamma"], params["bn2_beta"])),
             params["conv2_w"], params["conv2_b"], 2, 1)
    N, C, H, W = x_nchw.shape
    pooled = x_nchw.reshape(N, C, H // 2, 2, W // 2, 2).mean(axis=(3, 5))
    sc = conv(pooled, params["bypass_w"], params["bypass_b"], 1, 0)
    return h + sc


if __name__ == "__main__":
    # ResEncoderBlock(input_nc=4, output_nc=8) -> hidden_nc = input_nc = 4
    N, Cin, H, W = 2, 4, 16, 16
    Ch, Co = Cin, 8

    ks = jax.random.split(jax.random.PRNGKey(0), 10)
    params = {
        "bn1_gamma": jax.random.uniform(ks[0], (Cin,), jnp.float32, 0.5, 1.5),
        "bn1_beta":  jax.random.normal(ks[1], (Cin,)) * 0.1,
        "conv1_w":   jax.random.normal(ks[2], (Ch, Cin, 3, 3)) * 0.1,
        "conv1_b":   jax.random.normal(ks[3], (Ch,)) * 0.1,
        "bn2_gamma": jax.random.uniform(ks[4], (Ch,), jnp.float32, 0.5, 1.5),
        "bn2_beta":  jax.random.normal(ks[5], (Ch,)) * 0.1,
        "conv2_w":   jax.random.normal(ks[6], (Co, Ch, 4, 4)) * 0.1,
        "conv2_b":   jax.random.normal(ks[7], (Co,)) * 0.1,
        "bypass_w":  jax.random.normal(ks[8], (Co, Cin, 1, 1)) * 0.1,
        "bypass_b":  jax.random.normal(ks[9], (Co,)) * 0.1,
    }
    params = {k: v.astype(jnp.float32) for k, v in params.items()}
    x = jax.random.normal(jax.random.PRNGKey(0), (N, Cin, H, W), jnp.float32)

    consts = prepare_block_constants(params, N, H, W)      # built once per weight update
    forward = make_res_encoder_forward(N, Cin, H, W, Ch, Co)

    out = jax.block_until_ready(
        forward(x, consts["wpack"], consts["vecs"], consts["pmat"]))
    ref = jax.block_until_ready(reference_forward(x, params))

    assert out.shape == (N, Co, H // 2, W // 2), out.shape
    np.testing.assert_allclose(np.asarray(out), np.asarray(ref),
                               rtol=2e-2, atol=2e-2)
    print("KERNEL_OK")
</pallas_src>

<mosaic_0001>
module attributes {stable_mosaic.version = 11 : i64} {
  func.func @kernel(%arg0: i32, %arg1: memref<16x128xf32, #tpu.memory_space<vmem>>, %arg2: memref<8x64xf32, #tpu.memory_space<vmem>>, %arg3: memref<8x128xf32, #tpu.memory_space<vmem>>, %arg4: memref<2x128x128xf32, #tpu.memory_space<vmem>>, %arg5: memref<832x128xbf16, #tpu.memory_space<vmem>>, %arg6: memref<8x128xf32, #tpu.memory_space<vmem>>) attributes {dimension_semantics = [#tpu.dimension_semantics<arbitrary>], iteration_bounds = array<i64: 1>, scalar_prefetch = 0 : i64, scratch_operands = 0 : i64, tpu.core_type = #tpu.core_type<tc>, window_params = [{pipeline_mode = #tpu.pipeline_mode<synchronous>, transform_indices = @transform_0, window_bounds = array<i64: 16, 128>}, {pipeline_mode = #tpu.pipeline_mode<synchronous>, transform_indices = @transform_1, window_bounds = array<i64: 8, 64>}, {pipeline_mode = #tpu.pipeline_mode<synchronous>, transform_indices = @transform_2, window_bounds = array<i64: 8, 128>}, {pipeline_mode = #tpu.pipeline_mode<synchronous>, transform_indices = @transform_3, window_bounds = array<i64: 2, 128, 128>}, {pipeline_mode = #tpu.pipeline_mode<synchronous>, transform_indices = @transform_4, window_bounds = array<i64: 832, 128>}, {pipeline_mode = #tpu.pipeline_mode<synchronous>, transform_indices = @transform_5, window_bounds = array<i64: 8, 128>}]} {
    %c0 = arith.constant 0 : index
    %c0_0 = arith.constant 0 : index
    %0 = vector.load %arg3[%c0, %c0_0] : memref<8x128xf32, #tpu.memory_space<vmem>>, vector<8x128xf32>
    %1 = tpu.iota {dimensions = array<i32: 0>} : vector<16x1xi32>
    %c8_i32 = arith.constant 8 : i32
    %c0_i32 = arith.constant 0 : i32
    %2 = arith.cmpi eq, %c8_i32, %c0_i32 : i32
    %c1_i32 = arith.constant 1 : i32
    %3 = arith.select %2, %c1_i32, %c8_i32 : i32
    %4 = vector.broadcast %3 : i32 to vector<16x1xi32>
    %5 = arith.remsi %1, %4 : vector<16x1xi32>
    %c0_i32_1 = arith.constant 0 : i32
    %6 = vector.broadcast %c0_i32_1 : i32 to vector<16x1xi32>
    %7 = arith.cmpi ne, %5, %6 : vector<16x1xi32>
    %c0_i32_2 = arith.constant 0 : i32
    %8 = vector.broadcast %c0_i32_2 : i32 to vector<16x1xi32>
    %9 = arith.cmpi slt, %5, %8 : vector<16x1xi32>
    %c0_i32_3 = arith.constant 0 : i32
    %10 = arith.cmpi slt, %3, %c0_i32_3 : i32
    %11 = vector.broadcast %10 : i1 to vector<16x1xi1>
    %12 = vector.broadcast %11 : vector<16x1xi1> to vector<16x1xi1>
    %13 = arith.xori %9, %12 : vector<16x1xi1>
    %14 = arith.andi %13, %7 : vector<16x1xi1>
    %15 = vector.broadcast %3 : i32 to vector<16x1xi32>
    %16 = arith.addi %5, %15 : vector<16x1xi32>
    %17 = arith.select %14, %16, %5 : vector<16x1xi1>, vector<16x1xi32>
    %c0_i32_4 = arith.constant 0 : i32
    %18 = vector.broadcast %c0_i32_4 : i32 to vector<16x1xi32>
    %19 = arith.cmpi ne, %17, %18 : vector<16x1xi32>
    %20 = arith.extui %19 : vector<16x1xi1> to vector<16x1xi32>
    %21 = arith.sitofp %20 : vector<16x1xi32> to vector<16x1xf32>
    %c7_i32 = arith.constant 7 : i32
    %22 = vector.broadcast %c7_i32 : i32 to vector<16x1xi32>
    %23 = arith.cmpi ne, %17, %22 : vector<16x1xi32>
    %24 = arith.extui %23 : vector<16x1xi1> to vector<16x1xi32>
    %25 = arith.sitofp %24 : vector<16x1xi32> to vector<16x1xf32>
    %c0_5 = arith.constant 0 : index
    %c0_6 = arith.constant 0 : index
    %26 = vector.load %arg1[%c0_5, %c0_6] : memref<16x128xf32, #tpu.memory_space<vmem>>, vector<16x128xf32>
    %c0_7 = arith.constant 0 : index
    %c0_8 = arith.constant 0 : index
    %c0_9 = arith.constant 0 : index
    %27 = vector.load %arg4[%c0_7, %c0_8, %c0_9] : memref<2x128x128xf32, #tpu.memory_space<vmem>>, vector<1x128x128xf32>
    %28 = vector.shape_cast %27 : vector<1x128x128xf32> to vector<128x128xf32>
    %29 = vector.extract_strided_slice %0 {offsets = [0, 0], sizes = [1, 128], strides = [1, 1]} : vector<8x128xf32> to vector<1x128xf32>
    %30 = vector.extract_strided_slice %0 {offsets = [1, 0], sizes = [1, 128], strides = [1, 1]} : vector<8x128xf32> to vector<1x128xf32>
    %cst = arith.constant dense<0.000000e+00> : vector<128xf32>
    %31 = vector.multi_reduction <add>, %26, %cst [0] : vector<16x128xf32> to vector<128xf32>
    %32 = vector.shape_cast %31 : vector<128xf32> to vector<1x128xf32>
    %33 = arith.mulf %26, %26 : vector<16x128xf32>
    %cst_10 = arith.constant dense<0.000000e+00> : vector<128xf32>
    %34 = vector.multi_reduction <add>, %33, %cst_10 [0] : vector<16x128xf32> to vector<128xf32>
    %35 = vector.shape_cast %34 : vector<128xf32> to vector<1x128xf32>
    %36 = tpu.concatenate %32, %35 in 0 : vector<1x128xf32>, vector<1x128xf32> -> vector<2x128xf32>
    %cst_11 = arith.constant dense<0.000000e+00> : vector<2x128xf32>
    %37 = tpu.matmul %36, %28, %cst_11 {dimension_numbers = #tpu.dot_dimension_numbers<[1], [0], [0], [1], [0, 0, 1, 1], [], []>} : vector<2x128xf32>, vector<128x128xf32>, vector<2x128xf32> -> vector<2x128xf32>
    %38 = vector.extract_strided_slice %37 {offsets = [0, 0], sizes = [1, 128], strides = [1, 1]} : vector<2x128xf32> to vector<1x128xf32>
    %39 = vector.extract_strided_slice %37 {offsets = [1, 0], sizes = [1, 128], strides = [1, 1]} : vector<2x128xf32> to vector<1x128xf32>
    %40 = arith.mulf %38, %38 : vector<1x128xf32>
    %41 = arith.subf %39, %40 : vector<1x128xf32>
    %cst_12 = arith.constant 9.99999974E-6 : f32
    %42 = vector.broadcast %cst_12 : f32 to vector<1x128xf32>
    %43 = arith.addf %41, %42 : vector<1x128xf32>
    %44 = math.rsqrt %43 : vector<1x128xf32>
    %45 = arith.mulf %29, %44 : vector<1x128xf32>
    %46 = vector.broadcast %38 : vector<1x128xf32> to vector<16x128xf32>
    %47 = arith.subf %26, %46 : vector<16x128xf32>
    %48 = vector.broadcast %45 : vector<1x128xf32> to vector<16x128xf32>
    %49 = arith.mulf %47, %48 : vector<16x128xf32>
    %50 = vector.broadcast %30 : vector<1x128xf32> to vector<16x128xf32>
    %51 = arith.addf %49, %50 : vector<16x128xf32>
    %cst_13 = arith.constant 0.00999999977 : f32
    %52 = vector.broadcast %cst_13 : f32 to vector<16x128xf32>
    %53 = arith.mulf %52, %51 : vector<16x128xf32>
    %54 = arith.maximumf %51, %53 : vector<16x128xf32>
    %55 = vector.extract_strided_slice %54 {offsets = [15, 0], sizes = [1, 128], strides = [1, 1]} : vector<16x128xf32> to vector<1x128xf32>
    %56 = vector.extract_strided_slice %54 {offsets = [0, 0], sizes = [15, 128], strides = [1, 1]} : vector<16x128xf32> to vector<15x128xf32>
    %57 = tpu.concatenate %55, %56 in 0 : vector<1x128xf32>, vector<15x128xf32> -> vector<16x128xf32>
    %58 = vector.broadcast %21 : vector<16x1xf32> to vector<16x128xf32>
    %59 = arith.mulf %57, %58 : vector<16x128xf32>
    %60 = vector.extract_strided_slice %54 {offsets = [1, 0], sizes = [15, 128], strides = [1, 1]} : vector<16x128xf32> to vector<15x128xf32>
    %61 = vector.extract_strided_slice %54 {offsets = [0, 0], sizes = [1, 128], strides = [1, 1]} : vector<16x128xf32> to vector<1x128xf32>
    %62 = tpu.concatenate %60, %61 in 0 : vector<15x128xf32>, vector<1x128xf32> -> vector<16x128xf32>
    %63 = vector.broadcast %25 : vector<16x1xf32> to vector<16x128xf32>
    %64 = arith.mulf %62, %63 : vector<16x128xf32>
    %65 = tpu.concatenate %59, %54, %64 in 1 : vector<16x128xf32>, vector<16x128xf32>, vector<16x128xf32> -> vector<16x384xf32>
    %66 = arith.truncf %65 : vector<16x384xf32> to vector<16x384xbf16>
    %c0_14 = arith.constant 0 : index
    %c0_15 = arith.constant 0 : index
    %67 = vector.load %arg5[%c0_14, %c0_15] : memref<832x128xbf16, #tpu.memory_space<vmem>>, vector<384x128xbf16>
    %cst_16 = arith.constant dense<0.000000e+00> : vector<16x128xf32>
    %68 = tpu.matmul %66, %67, %cst_16 {dimension_numbers = #tpu.dot_dimension_numbers<[1], [0], [0], [1], [0, 0, 1, 1], [], []>} : vector<16x384xbf16>, vector<384x128xbf16>, vector<16x128xf32> -> vector<16x128xf32>
    %69 = vector.extract_strided_slice %0 {offsets = [4, 0], sizes = [1, 128], strides = [1, 1]} : vector<8x128xf32> to vector<1x128xf32>
    %70 = vector.broadcast %69 : vector<1x128xf32> to vector<16x128xf32>
    %71 = arith.addf %68, %70 : vector<16x128xf32>
    %c1 = arith.constant 1 : index
    %c0_17 = arith.constant 0 : index
    %c0_18 = arith.constant 0 : index
    %72 = vector.load %arg4[%c1, %c0_17, %c0_18] : memref<2x128x128xf32, #tpu.memory_space<vmem>>, vector<1x128x128xf32>
    %73 = vector.shape_cast %72 : vector<1x128x128xf32> to vector<128x128xf32>
    %74 = vector.extract_strided_slice %0 {offsets = [2, 0], sizes = [1, 128], strides = [1, 1]} : vector<8x128xf32> to vector<1x128xf32>
    %75 = vector.extract_strided_slice %0 {offsets = [3, 0], sizes = [1, 128], strides = [1, 1]} : vector<8x128xf32> to vector<1x128xf32>
    %cst_19 = arith.constant dense<0.000000e+00> : vector<128xf32>
    %76 = vector.multi_reduction <add>, %71, %cst_19 [0] : vector<16x128xf32> to vector<128xf32>
    %77 = vector.shape_cast %76 : vector<128xf32> to vector<1x128xf32>
    %78 = arith.mulf %71, %71 : vector<16x128xf32>
    %cst_20 = arith.constant dense<0.000000e+00> : vector<128xf32>
    %79 = vector.multi_reduction <add>, %78, %cst_20 [0] : vector<16x128xf32> to vector<128xf32>
    %80 = vector.shape_cast %79 : vector<128xf32> to vector<1x128xf32>
    %81 = tpu.concatenate %77, %80 in 0 : vector<1x128xf32>, vector<1x128xf32> -> vector<2x128xf32>
    %cst_21 = arith.constant dense<0.000000e+00> : vector<2x128xf32>
    %82 = tpu.matmul %81, %73, %cst_21 {dimension_numbers = #tpu.dot_dimension_numbers<[1], [0], [0], [1], [0, 0, 1, 1], [], []>} : vector<2x128xf32>, vector<128x128xf32>, vector<2x128xf32> -> vector<2x128xf32>
    %83 = vector.extract_strided_slice %82 {offsets = [0, 0], sizes = [1, 128], strides = [1, 1]} : vector<2x128xf32> to vector<1x128xf32>
    %84 = vector.extract_strided_slice %82 {offsets = [1, 0], sizes = [1, 128], strides = [1, 1]} : vector<2x128xf32> to vector<1x128xf32>
    %85 = arith.mulf %83, %83 : vector<1x128xf32>
    %86 = arith.subf %84, %85 : vector<1x128xf32>
    %cst_22 = arith.constant 9.99999974E-6 : f32
    %87 = vector.broadcast %cst_22 : f32 to vector<1x128xf32>
    %88 = arith.addf %86, %87 : vector<1x128xf32>
    %89 = math.rsqrt %88 : vector<1x128xf32>
    %90 = arith.mulf %74, %89 : vector<1x128xf32>
    %91 = vector.broadcast %83 : vector<1x128xf32> to vector<16x128xf32>
    %92 = arith.subf %71, %91 : vector<16x128xf32>
    %93 = vector.broadcast %90 : vector<1x128xf32> to vector<16x128xf32>
    %94 = arith.mulf %92, %93 : vector<16x128xf32>
    %95 = vector.broadcast %75 : vector<1x128xf32> to vector<16x128xf32>
    %96 = arith.addf %94, %95 : vector<16x128xf32>
    %cst_23 = arith.constant 0.00999999977 : f32
    %97 = vector.broadcast %cst_23 : f32 to vector<16x128xf32>
    %98 = arith.mulf %97, %96 : vector<16x128xf32>
    %99 = arith.maximumf %96, %98 : vector<16x128xf32>
    %100 = vector.extract_strided_slice %99 {offsets = [15, 0], sizes = [1, 128], strides = [1, 1]} : vector<16x128xf32> to vector<1x128xf32>
    %101 = vector.extract_strided_slice %99 {offsets = [0, 0], sizes = [15, 128], strides = [1, 1]} : vector<16x128xf32> to vector<15x128xf32>
    %102 = tpu.concatenate %100, %101 in 0 : vector<1x128xf32>, vector<15x128xf32> -> vector<16x128xf32>
    %103 = vector.broadcast %21 : vector<16x1xf32> to vector<16x128xf32>
    %104 = arith.mulf %102, %103 : vector<16x128xf32>
    %105 = vector.extract_strided_slice %99 {offsets = [1, 0], sizes = [15, 128], strides = [1, 1]} : vector<16x128xf32> to vector<15x128xf32>
    %106 = vector.extract_strided_slice %99 {offsets = [0, 0], sizes = [1, 128], strides = [1, 1]} : vector<16x128xf32> to vector<1x128xf32>
    %107 = tpu.concatenate %105, %106 in 0 : vector<15x128xf32>, vector<1x128xf32> -> vector<16x128xf32>
    %108 = vector.broadcast %25 : vector<16x1xf32> to vector<16x128xf32>
    %109 = arith.mulf %107, %108 : vector<16x128xf32>
    %110 = tpu.concatenate %104, %99, %109 in 1 : vector<16x128xf32>, vector<16x128xf32>, vector<16x128xf32> -> vector<16x384xf32>
    %111 = arith.truncf %110 : vector<16x384xf32> to vector<16x384xbf16>
    %c384 = arith.constant 384 : index
    %c0_24 = arith.constant 0 : index
    %112 = vector.load %arg5[%c384, %c0_24] : memref<832x128xbf16, #tpu.memory_space<vmem>>, vector<384x64xbf16>
    %cst_25 = arith.constant dense<0.000000e+00> : vector<16x64xf32>
    %113 = tpu.matmul %111, %112, %cst_25 {dimension_numbers = #tpu.dot_dimension_numbers<[1], [0], [0], [1], [0, 0, 1, 1], [], []>} : vector<16x384xbf16>, vector<384x64xbf16>, vector<16x64xf32> -> vector<16x64xf32>
    %114 = vector.extract_strided_slice %113 {offsets = [0, 0], sizes = [8, 64], strides = [1, 1]} : vector<16x64xf32> to vector<8x64xf32>
    %115 = vector.extract_strided_slice %113 {offsets = [8, 0], sizes = [8, 64], strides = [1, 1]} : vector<16x64xf32> to vector<8x64xf32>
    %116 = tpu.concatenate %114, %115 in 1 : vector<8x64xf32>, vector<8x64xf32> -> vector<8x128xf32>
    %c0_26 = arith.constant 0 : index
    %c0_27 = arith.constant 0 : index
    %117 = vector.load %arg2[%c0_26, %c0_27] : memref<8x64xf32, #tpu.memory_space<vmem>>, vector<8x64xf32>
    %118 = arith.truncf %117 : vector<8x64xf32> to vector<8x64xbf16>
    %c768 = arith.constant 768 : index
    %c0_28 = arith.constant 0 : index
    %119 = vector.load %arg5[%c768, %c0_28] : memref<832x128xbf16, #tpu.memory_space<vmem>>, vector<64x128xbf16>
    %cst_29 = arith.constant dense<0.000000e+00> : vector<8x128xf32>
    %120 = tpu.matmul %118, %119, %cst_29 {dimension_numbers = #tpu.dot_dimension_numbers<[1], [0], [0], [1], [0, 0, 1, 1], [], []>} : vector<8x64xbf16>, vector<64x128xbf16>, vector<8x128xf32> -> vector<8x128xf32>
    %121 = arith.addf %116, %120 : vector<8x128xf32>
    %122 = vector.extract_strided_slice %0 {offsets = [5, 0], sizes = [1, 128], strides = [1, 1]} : vector<8x128xf32> to vector<1x128xf32>
    %123 = vector.broadcast %122 : vector<1x128xf32> to vector<8x128xf32>
    %124 = arith.addf %121, %123 : vector<8x128xf32>
    %c0_30 = arith.constant 0 : index
    %c0_31 = arith.constant 0 : index
    %125 = vector.load %arg6[%c0_30, %c0_31] : memref<8x128xf32, #tpu.memory_space<vmem>>, vector<8x128xf32>
    tpu.vector_store %arg6[%c0_30, %c0_31], %124 {strides = array<i32>} : memref<8x128xf32, #tpu.memory_space<vmem>>, vector<8x128xf32>,
    return
  }
  func.func @transform_0(%arg0: i32) -> (i32, i32) {
    %c0_i32 = arith.constant 0 : i32
    %c0_i32_0 = arith.constant 0 : i32
    %c0_i32_1 = arith.constant 0 : i32
    return %c0_i32, %c0_i32_0 : i32, i32
  }
  func.func @transform_1(%arg0: i32) -> (i32, i32) {
    %c0_i32 = arith.constant 0 : i32
    %c0_i32_0 = arith.constant 0 : i32
    %c0_i32_1 = arith.constant 0 : i32
    return %c0_i32, %c0_i32_0 : i32, i32
  }
  func.func @transform_2(%arg0: i32) -> (i32, i32) {
    %c0_i32 = arith.constant 0 : i32
    %c0_i32_0 = arith.constant 0 : i32
    %c0_i32_1 = arith.constant 0 : i32
    return %c0_i32, %c0_i32_0 : i32, i32
  }
  func.func @transform_3(%arg0: i32) -> (i32, i32, i32) {
    %c0_i32 = arith.constant 0 : i32
    %c0_i32_0 = arith.constant 0 : i32
    %c0_i32_1 = arith.constant 0 : i32
    %c0_i32_2 = arith.constant 0 : i32
    return %c0_i32, %c0_i32_0, %c0_i32_1 : i32, i32, i32
  }
  func.func @transform_4(%arg0: i32) -> (i32, i32) {
    %c0_i32 = arith.constant 0 : i32
    %c0_i32_0 = arith.constant 0 : i32
    %c0_i32_1 = arith.constant 0 : i32
    return %c0_i32, %c0_i32_0 : i32, i32
  }
  func.func @transform_5(%arg0: i32) -> (i32, i32) {
    %c0_i32 = arith.constant 0 : i32
    %c0_i32_0 = arith.constant 0 : i32
    %c0_i32_1 = arith.constant 0 : i32
    return %c0_i32, %c0_i32_0 : i32, i32
  }
}

</mosaic_0001>

<llo_original>
// kernel: forward.1
$region0: #{forward.1}
  #allocation0 [shape = 'u32[]', space=smem, size = 0x4, offset = 0x4, fixed_abs, tag = 'smem constant byte address 0x4 - core index']
  #allocation1 [shape = 'u32[144,128]{1,0:T(1,128)}', space=vmem, size = 0x12000, scoped, tag = 'internal scratch']
  %s0 = inlined_call_operand.vmem [shape: f32[16,128], index: 0, kind: input, shape index: {}]
  %s1 = inlined_call_operand.vmem [shape: f32[8,64], index: 1, kind: input, shape index: {}]
  %s2 = inlined_call_operand.vmem [shape: f32[8,128], index: 2, kind: input, shape index: {}]
  %s3 = inlined_call_operand.vmem [shape: f32[2,128,128], index: 3, kind: input, shape index: {}]
  %s4 = inlined_call_operand.vmem [shape: bf16[832,128], index: 4, kind: input, shape index: {}]
  %s5 = inlined_call_operand.vmem [shape: f32[8,128], index: 5, kind: output, shape index: {}]
  %s6 = sld [smem:[#allocation0]]
  $region30: #{forward.1} parent=0
    _
  %s8 = ssub.s32 1, %s6
  %s9 = scalar_select 0, %s8, %s6
  // Predicated region
  $region2: #{forward.1} parent=0 // pred_check
    _
  $region3: #{forward.1} parent=0 // pred_check_branch
    %11 = sbr.rel (0) target = $region5
  $region4: #{forward.1} parent=0 // pred_region
    _
  $region5: #{forward.1} parent=0 // pred_fallthru
    _
  // Predicated region
  $region6: #{forward.1} parent=0 // pred_check
    _
  $region7: #{forward.1} parent=0 // pred_check_branch
    %13 = sbr.rel (0) target = $region9
  $region8: #{forward.1} parent=0 // pred_region
    _
  $region9: #{forward.1} parent=0 // pred_fallthru
    _
  // Predicated region
  $region10: #{forward.1} parent=0 // pred_check
    _
  $region11: #{forward.1} parent=0 // pred_check_branch
    %15 = sbr.rel (0) target = $region13
  $region12: #{forward.1} parent=0 // pred_region
    _
  $region13: #{forward.1} parent=0 // pred_fallthru
    _
  // Predicated region
  $region14: #{forward.1} parent=0 // pred_check
    _
  $region15: #{forward.1} parent=0 // pred_check_branch
    %17 = sbr.rel (0) target = $region17
  $region16: #{forward.1} parent=0 // pred_region
    _
  $region17: #{forward.1} parent=0 // pred_fallthru
    _
  // Predicated region
  $region18: #{forward.1} parent=0 // pred_check
    _
  $region19: #{forward.1} parent=0 // pred_check_branch
    %19 = sbr.rel (0) target = $region21
  $region20: #{forward.1} parent=0 // pred_region
    _
  $region21: #{forward.1} parent=0 // pred_fallthru
    _
  %v21 = vld [vmem:[%s2] sm:$0xff]
  %v22 = vlaneseq
  %v23 = vshrl.u32 %v22, 7
  %v24 = vadd.s32 %v23, 8
  %vm25 = vcmp.lt.s32.totalorder %v23, 0
  %v26 = vsub.s32 0, %v23
  %v27 = vsel %vm25, %v26, %v23
  %v28 = vshrl.u32 %v27, 3
  %v29 = vand.u32 %v27, 7
  %v30 = vsub.s32 0, %v29
  %v31 = vsel %vm25, %v30, %v29
  %vm32 = vcmp.lt.s32.totalorder %v24, 0
  %v33 = vsub.s32 0, %v24
  %v34 = vsel %vm32, %v33, %v24
  %v35 = vshrl.u32 %v34, 3
  %v36 = vand.u32 %v34, 7
  %v37 = vsub.s32 0, %v36
  %v38 = vsel %vm32, %v37, %v36
  %vm39 = vcmp.ne.s32.totalorder %v31, 0
  %vm40 = vcmp.ne.s32.totalorder %v38, 0
  %vm41 = vcmp.lt.s32.totalorder %v31, 0
  %vm42 = vcmp.lt.s32.totalorder %v38, 0
  %vm43 = vmand %vm41, %vm39
  %vm44 = vmand %vm42, %vm40
  %v45 = vadd.s32 %v31, 8
  %v46 = vadd.s32 %v38, 8
  %v47 = vsel %vm43, %v45, %v31
  %v48 = vsel %vm44, %v46, %v38
  %vm49 = vcmp.ne.s32.totalorder %v47, 0
  %vm50 = vcmp.ne.s32.totalorder %v48, 0
  %v51 = vsel %vm49, 1, 0
  %v52 = vsel %vm50, 1, 0
  %v53 = vcvt.s32.f32 %v51
  %v54 = vcvt.s32.f32 %v52
  %vm55 = vcmp.ne.s32.totalorder %v47, 7
  %vm56 = vcmp.ne.s32.totalorder %v48, 7
  %v57 = vsel %vm55, 1, 0
  %v58 = vsel %vm56, 1, 0
  %v59 = vcvt.s32.f32 %v57
  %v60 = vcvt.s32.f32 %v58
  %v61 = vld [vmem:[%s0] sm:$0xff]
  %v62 = vld [vmem:[%s0 + $0x8] sm:$0xff]
  %v63 = vld [vmem:[%s3] sm:$0xff]
  %v64 = vld [vmem:[%s3 + $0x8] sm:$0xff]
  %v65 = vld [vmem:[%s3 + $0x10] sm:$0xff]
  %v66 = vld [vmem:[%s3 + $0x18] sm:$0xff]
  %v67 = vld [vmem:[%s3 + $0x20] sm:$0xff]
  %v68 = vld [vmem:[%s3 + $0x28] sm:$0xff]
  %v69 = vld [vmem:[%s3 + $0x30] sm:$0xff]
  %v70 = vld [vmem:[%s3 + $0x38] sm:$0xff]
  %v71 = vld [vmem:[%s3 + $0x40] sm:$0xff]
  %v72 = vld [vmem:[%s3 + $0x48] sm:$0xff]
  %v73 = vld [vmem:[%s3 + $0x50] sm:$0xff]
  %v74 = vld [vmem:[%s3 + $0x58] sm:$0xff]
  %v75 = vld [vmem:[%s3 + $0x60] sm:$0xff]
  %v76 = vld [vmem:[%s3 + $0x68] sm:$0xff]
  %v77 = vld [vmem:[%s3 + $0x70] sm:$0xff]
  %v78 = vld [vmem:[%s3 + $0x78] sm:$0xff]
  %v79 = vadd.f32 %v61, %v62
  %v80 = vrot.slane %v79, 4
  %v81 = vadd.f32 %v79, %v80
  %v82 = vrot.slane %v81, 2
  %v83 = vadd.f32 %v81, %v82
  %v84 = vrot.slane %v83, 1
  %v85 = vadd.f32 %v83, %v84
  %v86 = vmul.f32 %v61, %v61
  %v87 = vmul.f32 %v62, %v62
  %v88 = vadd.f32 %v86, %v87
  %v89 = vrot.slane %v88, 4
  %v90 = vadd.f32 %v88, %v89
  %v91 = vrot.slane %v90, 2
  %v92 = vadd.f32 %v90, %v91
  %v93 = vrot.slane %v92, 1
  %v94 = vadd.f32 %v92, %v93
  %vm95 = vcmask 1040384
  %v96 = vsel %vm95, %v85, %v94
  %97 = vmatprep.subr.mxu0 0.0
  %98 = vmatpush1.msra.mxu0 %v63
  %99 = vmatprep.subr.mxu0 0.0
  %100 = vmatpush1.msra.mxu0 %v64
  %101 = vmatprep.subr.mxu0 0.0
  %102 = vmatpush1.msra.mxu0 %v65
  %103 = vmatprep.subr.mxu0 0.0
  %104 = vmatpush1.msra.mxu0 %v66
  %105 = vmatprep.subr.mxu0 0.0
  %106 = vmatpush1.msra.mxu0 %v67
  %107 = vmatprep.subr.mxu0 0.0
  %108 = vmatpush1.msra.mxu0 %v68
  %109 = vmatprep.subr.mxu0 0.0
  %110 = vmatpush1.msra.mxu0 %v69
  %111 = vmatprep.subr.mxu0 0.0
  %112 = vmatpush1.msra.mxu0 %v70
  %113 = vmatprep.subr.mxu0 0.0
  %114 = vmatpush1.msra.mxu0 %v71
  %115 = vmatprep.subr.mxu0 0.0
  %116 = vmatpush1.msra.mxu0 %v72
  %117 = vmatprep.subr.mxu0 0.0
  %118 = vmatpush1.msra.mxu0 %v73
  %119 = vmatprep.subr.mxu0 0.0
  %120 = vmatpush1.msra.mxu0 %v74
  %121 = vmatprep.subr.mxu0 0.0
  %122 = vmatpush1.msra.mxu0 %v75
  %123 = vmatprep.subr.mxu0 0.0
  %124 = vmatpush1.msra.mxu0 %v76
  %125 = vmatprep.subr.mxu0 0.0
  %126 = vmatpush1.msra.mxu0 %v77
  %127 = vmatprep.subr.mxu0 0.0
  %128 = vmatpush1.msra.mxu0 %v78
  %129 = vmatprep.subr.mxu0 0.0
  %130 = vmatpush1.msra.mxu0 0.0
  %131 = vmatprep.subr.mxu0 0.0
  %132 = vmatpush1.msra.mxu0 0.0
  %133 = vmatprep.subr.mxu0 0.0
  %134 = vmatpush1.msra.mxu0 0.0
  %135 = vmatprep.subr.mxu0 0.0
  %136 = vmatpush1.msra.mxu0 0.0
  %137 = vmatprep.subr.mxu0 0.0
  %138 = vmatpush1.msra.mxu0 0.0
  %139 = vmatprep.subr.mxu0 0.0
  %140 = vmatpush1.msra.mxu0 0.0
  %141 = vmatprep.subr.mxu0 0.0
  %142 = vmatpush1.msra.mxu0 0.0
  %143 = vmatprep.subr.mxu0 0.0
  %144 = vmatpush1.msra.mxu0 0.0
  %145 = vmatprep.subr.mxu0 0.0
  %146 = vmatpush1.msra.mxu0 0.0
  %147 = vmatprep.subr.mxu0 0.0
  %148 = vmatpush1.msra.mxu0 0.0
  %149 = vmatprep.subr.mxu0 0.0
  %150 = vmatpush1.msra.mxu0 0.0
  %151 = vmatprep.subr.mxu0 0.0
  %152 = vmatpush1.msra.mxu0 0.0
  %153 = vmatprep.subr.mxu0 0.0
  %154 = vmatpush1.msra.mxu0 0.0
  %155 = vmatprep.subr.mxu0 0.0
  %156 = vmatpush1.msra.mxu0 0.0
  %157 = vmatprep.subr.mxu0 0.0
  %158 = vmatpush1.msra.mxu0 0.0
  %159 = vmatprep.subr.mxu0 0.0
  %160 = vmatpush1.msra.mxu0 0.0
  %161 = vmatprep.mubr.f32.mxu0 0.0
  %162 = vmatmul.mubr.f32.gmra.mrb[0].mxu0 %v96
  %v163 = vpop.f32.mrb[0].mxu0
  %v164 = vadd.f32 0.0, %v163
  %v165 = vpop.f32.mrb[0].mxu0
  %166 = vdwg.mxu0
  %v167 = vmul.f32 %v164, %v164
  %v169 = vrot.slane %v167, 7
  %v171 = vsub.f32 %v164, %v169
  %v172 = vadd.f32 %v171, 1e-05
  %v173 = vrsqrt.pop %v172
  %v175 = vrot.slane %v173, 1
  %v177 = vmul.f32 %v21, %v175
  %v178 = vlaneseq
  %v179 = vshrl.u32 %v178, 7
  %v180 = vsub.s32 0, %v179
  %v181 = vrot.slane %v164, %v180
  %v182 = vsub.f32 %v61, %v181
  %v183 = vsub.f32 %v62, %v181
  %v184 = vlaneseq
  %v185 = vshrl.u32 %v184, 7
  %v186 = vsub.s32 0, %v185
  %v187 = vrot.slane %v177, %v186
  %v188 = vmul.f32 %v182, %v187
  %v189 = vmul.f32 %v183, %v187
  %v190 = vlaneseq
  %v191 = vshrl.u32 %v190, 7
  %v192 = vsub.s32 1, %v191
  %v193 = vrot.slane %v21, %v192
  %v194 = vadd.f32 %v188, %v193
  %v195 = vadd.f32 %v189, %v193
  %v196 = vmul.f32 %v194, 0.01
  %v197 = vmul.f32 %v195, 0.01
  %v198 = vmax.f32 %v194, %v196
  %v199 = vmax.f32 %v195, %v197
  %v201 = vrot.slane %v199, 7
  %v204 = vrot.slane %v198, 7
  %v205 = vsel %vm95, %v204, %v201
  %v208 = vsel %vm95, %v201, %v204
  %v209 = vmul.f32 %v208, %v53
  %v210 = vmul.f32 %v205, %v54
  %vm211 = vcmask 1046528
  %v212 = vrot.slane %v198, 1
  %v213 = vrot.slane %v199, 1
  %v214 = vsel %vm211, %v212, %v213
  %v218 = vsel %vm211, %v213, %v212
  %v219 = vmul.f32 %v214, %v59
  %v220 = vmul.f32 %v218, %v60
  %v221 = vpack.c.bf16 %v210, %v209
  %v222 = vpack.c.bf16 %v199, %v198
  %v223 = vpack.c.bf16 %v220, %v219
  %v224 = vld [vmem:[%s4] sm:$0xf]
  %v225 = vld [vmem:[%s4 + $0x4] sm:$0xf]
  %v226 = vld [vmem:[%s4 + $0x8] sm:$0xf]
  %v227 = vld [vmem:[%s4 + $0xc] sm:$0xf]
  %v228 = vld [vmem:[%s4 + $0x10] sm:$0xf]
  %v229 = vld [vmem:[%s4 + $0x14] sm:$0xf]
  %v230 = vld [vmem:[%s4 + $0x18] sm:$0xf]
  %v231 = vld [vmem:[%s4 + $0x1c] sm:$0xf]
  %v232 = vld [vmem:[%s4 + $0x20] sm:$0xf]
  %v233 = vld [vmem:[%s4 + $0x24] sm:$0xf]
  %v234 = vld [vmem:[%s4 + $0x28] sm:$0xf]
  %v235 = vld [vmem:[%s4 + $0x2c] sm:$0xf]
  %v236 = vld [vmem:[%s4 + $0x30] sm:$0xf]
  %v237 = vld [vmem:[%s4 + $0x34] sm:$0xf]
  %v238 = vld [vmem:[%s4 + $0x38] sm:$0xf]
  %v239 = vld [vmem:[%s4 + $0x3c] sm:$0xf]
  %v240 = vld [vmem:[%s4 + $0x40] sm:$0xf]
  %v241 = vld [vmem:[%s4 + $0x44] sm:$0xf]
  %v242 = vld [vmem:[%s4 + $0x48] sm:$0xf]
  %v243 = vld [vmem:[%s4 + $0x4c] sm:$0xf]
  %v244 = vld [vmem:[%s4 + $0x50] sm:$0xf]
  %v245 = vld [vmem:[%s4 + $0x54] sm:$0xf]
  %v246 = vld [vmem:[%s4 + $0x58] sm:$0xf]
  %v247 = vld [vmem:[%s4 + $0x5c] sm:$0xf]
  %v248 = vld [vmem:[%s4 + $0x60] sm:$0xf]
  %v249 = vld [vmem:[%s4 + $0x64] sm:$0xf]
  %v250 = vld [vmem:[%s4 + $0x68] sm:$0xf]
  %v251 = vld [vmem:[%s4 + $0x6c] sm:$0xf]
  %v252 = vld [vmem:[%s4 + $0x70] sm:$0xf]
  %v253 = vld [vmem:[%s4 + $0x74] sm:$0xf]
  %v254 = vld [vmem:[%s4 + $0x78] sm:$0xf]
  %v255 = vld [vmem:[%s4 + $0x7c] sm:$0xf]
  %v256 = vld [vmem:[%s4 + $0x80] sm:$0xf]
  %v257 = vld [vmem:[%s4 + $0x84] sm:$0xf]
  %v258 = vld [vmem:[%s4 + $0x88] sm:$0xf]
  %v259 = vld [vmem:[%s4 + $0x8c] sm:$0xf]
  %v260 = vld [vmem:[%s4 + $0x90] sm:$0xf]
  %v261 = vld [vmem:[%s4 + $0x94] sm:$0xf]
  %v262 = vld [vmem:[%s4 + $0x98] sm:$0xf]
  %v263 = vld [vmem:[%s4 + $0x9c] sm:$0xf]
  %v264 = vld [vmem:[%s4 + $0xa0] sm:$0xf]
  %v265 = vld [vmem:[%s4 + $0xa4] sm:$0xf]
  %v266 = vld [vmem:[%s4 + $0xa8] sm:$0xf]
  %v267 = vld [vmem:[%s4 + $0xac] sm:$0xf]
  %v268 = vld [vmem:[%s4 + $0xb0] sm:$0xf]
  %v269 = vld [vmem:[%s4 + $0xb4] sm:$0xf]
  %v270 = vld [vmem:[%s4 + $0xb8] sm:$0xf]
  %v271 = vld [vmem:[%s4 + $0xbc] sm:$0xf]
  %v272 = vlaneseq
  %v273 = vshrl.u32 %v272, 7
  %v274 = vsub.s32 4, %v273
  %v275 = vrot.slane %v21, %v274
  %v324 = vunpack.c.l.b16 %v224
  %v325 = vunpack.c.l.b16 %v225
  %v326 = vunpack.c.l.b16 %v226
  %v327 = vunpack.c.l.b16 %v227
  %v328 = vunpack.c.l.b16 %v228
  %v329 = vunpack.c.l.b16 %v229
  %v330 = vunpack.c.l.b16 %v230
  %v331 = vunpack.c.l.b16 %v231
  %v332 = vunpack.c.l.b16 %v232
  %v333 = vunpack.c.l.b16 %v233
  %v334 = vunpack.c.l.b16 %v234
  %v335 = vunpack.c.l.b16 %v235
  %v336 = vunpack.c.l.b16 %v236
  %v337 = vunpack.c.l.b16 %v237
  %v338 = vunpack.c.l.b16 %v238
  %v339 = vunpack.c.l.b16 %v239
  %v340 = vunpack.c.l.b16 %v240
  %v341 = vunpack.c.l.b16 %v241
  %v342 = vunpack.c.l.b16 %v242
  %v343 = vunpack.c.l.b16 %v243
  %v344 = vunpack.c.l.b16 %v244
  %v345 = vunpack.c.l.b16 %v245
  %v346 = vunpack.c.l.b16 %v246
  %v347 = vunpack.c.l.b16 %v247
  %v348 = vunpack.c.l.b16 %v248
  %v349 = vunpack.c.l.b16 %v249
  %v350 = vunpack.c.l.b16 %v250
  %v351 = vunpack.c.l.b16 %v251
  %v352 = vunpack.c.l.b16 %v252
  %v353 = vunpack.c.l.b16 %v253
  %v354 = vunpack.c.l.b16 %v254
  %v355 = vunpack.c.l.b16 %v255
  %v356 = vunpack.c.l.b16 %v256
  %v357 = vunpack.c.l.b16 %v257
  %v358 = vunpack.c.l.b16 %v258
  %v359 = vunpack.c.l.b16 %v259
  %v360 = vunpack.c.l.b16 %v260
  %v361 = vunpack.c.l.b16 %v261
  %v362 = vunpack.c.l.b16 %v262
  %v363 = vunpack.c.l.b16 %v263
  %v364 = vunpack.c.l.b16 %v264
  %v365 = vunpack.c.l.b16 %v265
  %v366 = vunpack.c.l.b16 %v266
  %v367 = vunpack.c.l.b16 %v267
  %v368 = vunpack.c.l.b16 %v268
  %v369 = vunpack.c.l.b16 %v269
  %v370 = vunpack.c.l.b16 %v270
  %v371 = vunpack.c.l.b16 %v271
  %v372 = vpack.c.b16 %v325, %v324
  %v373 = vpack.c.b16 %v327, %v326
  %v374 = vpack.c.b16 %v329, %v328
  %v375 = vpack.c.b16 %v331, %v330
  %v376 = vpack.c.b16 %v333, %v332
  %v377 = vpack.c.b16 %v335, %v334
  %v378 = vpack.c.b16 %v337, %v336
  %v379 = vpack.c.b16 %v339, %v338
  %v380 = vpack.c.b16 %v341, %v340
  %v381 = vpack.c.b16 %v343, %v342
  %v382 = vpack.c.b16 %v345, %v344
  %v383 = vpack.c.b16 %v347, %v346
  %v384 = vpack.c.b16 %v349, %v348
  %v385 = vpack.c.b16 %v351, %v350
  %v386 = vpack.c.b16 %v353, %v352
  %v387 = vpack.c.b16 %v355, %v354
  %v388 = vpack.c.b16 %v357, %v356
  %v389 = vpack.c.b16 %v359, %v358
  %v390 = vpack.c.b16 %v361, %v360
  %v391 = vpack.c.b16 %v363, %v362
  %v392 = vpack.c.b16 %v365, %v364
  %v393 = vpack.c.b16 %v367, %v366
  %v394 = vpack.c.b16 %v369, %v368
  %v395 = vpack.c.b16 %v371, %v370
  %420 = vmatprep.subr.bf16.mxu0 0
  %421 = vmatpush1.bf16.msra.mxu0 %v372
  %422 = vmatprep.subr.bf16.mxu0 0
  %423 = vmatpush1.bf16.msra.mxu0 %v373
  %424 = vmatprep.subr.bf16.mxu0 0
  %425 = vmatpush1.bf16.msra.mxu0 %v374
  %426 = vmatprep.subr.bf16.mxu0 0
  %427 = vmatpush1.bf16.msra.mxu0 %v375
  %428 = vmatprep.subr.bf16.mxu0 0
  %429 = vmatpush1.bf16.msra.mxu0 %v376
  %430 = vmatprep.subr.bf16.mxu0 0
  %431 = vmatpush1.bf16.msra.mxu0 %v377
  %432 = vmatprep.subr.bf16.mxu0 0
  %433 = vmatpush1.bf16.msra.mxu0 %v378
  %434 = vmatprep.subr.bf16.mxu0 0
  %435 = vmatpush1.bf16.msra.mxu0 %v379
  %436 = vmatprep.subr.bf16.mxu0 0
  %437 = vmatpush1.bf16.msra.mxu0 %v380
  %438 = vmatprep.subr.bf16.mxu0 0
  %439 = vmatpush1.bf16.msra.mxu0 %v381
  %440 = vmatprep.subr.bf16.mxu0 0
  %441 = vmatpush1.bf16.msra.mxu0 %v382
  %442 = vmatprep.subr.bf16.mxu0 0
  %443 = vmatpush1.bf16.msra.mxu0 %v383
  %444 = vmatprep.subr.bf16.mxu0 0
  %445 = vmatpush1.bf16.msra.mxu0 %v384
  %446 = vmatprep.subr.bf16.mxu0 0
  %447 = vmatpush1.bf16.msra.mxu0 %v385
  %448 = vmatprep.subr.bf16.mxu0 0
  %449 = vmatpush1.bf16.msra.mxu0 %v386
  %450 = vmatprep.subr.bf16.mxu0 0
  %451 = vmatpush1.bf16.msra.mxu0 %v387
  %452 = vmatprep.mubr.bf16.mxu0 %v222
  %453 = vmatmul.mubr.bf16.gmra.mrb[0].mxu0 %v221
  %v454 = vpop.f32.mrb[0].mxu0
  %v455 = vadd.f32 %v275, %v454
  %v456 = vpop.f32.mrb[0].mxu0
  %v457 = vpop.f32.mrb[0].mxu0
  %v458 = vadd.f32 %v275, %v457
  %v459 = vpop.f32.mrb[0].mxu0
  %460 = vdwg.mxu0
  %461 = vmatprep.subr.bf16.mxu0 0
  %462 = vmatpush1.bf16.msra.mxu0 %v388
  %463 = vmatprep.subr.bf16.mxu0 0
  %464 = vmatpush1.bf16.msra.mxu0 %v389
  %465 = vmatprep.subr.bf16.mxu0 0
  %466 = vmatpush1.bf16.msra.mxu0 %v390
  %467 = vmatprep.subr.bf16.mxu0 0
  %468 = vmatpush1.bf16.msra.mxu0 %v391
  %469 = vmatprep.subr.bf16.mxu0 0
  %470 = vmatpush1.bf16.msra.mxu0 %v392
  %471 = vmatprep.subr.bf16.mxu0 0
  %472 = vmatpush1.bf16.msra.mxu0 %v393
  %473 = vmatprep.subr.bf16.mxu0 0
  %474 = vmatpush1.bf16.msra.mxu0 %v394
  %475 = vmatprep.subr.bf16.mxu0 0
  %476 = vmatpush1.bf16.msra.mxu0 %v395
  %477 = vmatprep.subr.bf16.mxu0 0
  %478 = vmatpush1.bf16.msra.mxu0 0
  %479 = vmatprep.subr.bf16.mxu0 0
  %480 = vmatpush1.bf16.msra.mxu0 0
  %481 = vmatprep.subr.bf16.mxu0 0
  %482 = vmatpush1.bf16.msra.mxu0 0
  %483 = vmatprep.subr.bf16.mxu0 0
  %484 = vmatpush1.bf16.msra.mxu0 0
  %485 = vmatprep.subr.bf16.mxu0 0
  %486 = vmatpush1.bf16.msra.mxu0 0
  %487 = vmatprep.subr.bf16.mxu0 0
  %488 = vmatpush1.bf16.msra.mxu0 0
  %489 = vmatprep.subr.bf16.mxu0 0
  %490 = vmatpush1.bf16.msra.mxu0 0
  %491 = vmatprep.subr.bf16.mxu0 0
  %492 = vmatpush1.bf16.msra.mxu0 0
  %493 = vmatprep.mubr.bf16.mxu0 0
  %494 = vmatmul.mubr.bf16.gmra.mrb[0].mxu0 %v223
  %v495 = vpop.f32.mrb[0].mxu0
  %v496 = vadd.f32 %v455, %v495
  %v497 = vpop.f32.mrb[0].mxu0
  %v498 = vpop.f32.mrb[0].mxu0
  %v499 = vadd.f32 %v458, %v498
  %v500 = vpop.f32.mrb[0].mxu0
  %501 = vdwg.mxu0
  %s502 = scalar_lea.vmem %s3, 128
  %v503 = vld [vmem:[%s502] sm:$0xff]
  %v504 = vld [vmem:[%s502 + $0x8] sm:$0xff]
  %v505 = vld [vmem:[%s502 + $0x10] sm:$0xff]
  %v506 = vld [vmem:[%s502 + $0x18] sm:$0xff]
  %v507 = vld [vmem:[%s502 + $0x20] sm:$0xff]
  %v508 = vld [vmem:[%s502 + $0x28] sm:$0xff]
  %v509 = vld [vmem:[%s502 + $0x30] sm:$0xff]
  %v510 = vld [vmem:[%s502 + $0x38] sm:$0xff]
  %v511 = vld [vmem:[%s502 + $0x40] sm:$0xff]
  %v512 = vld [vmem:[%s502 + $0x48] sm:$0xff]
  %v513 = vld [vmem:[%s502 + $0x50] sm:$0xff]
  %v514 = vld [vmem:[%s502 + $0x58] sm:$0xff]
  %v515 = vld [vmem:[%s502 + $0x60] sm:$0xff]
  %v516 = vld [vmem:[%s502 + $0x68] sm:$0xff]
  %v517 = vld [vmem:[%s502 + $0x70] sm:$0xff]
  %v518 = vld [vmem:[%s502 + $0x78] sm:$0xff]
  %v519 = vadd.f32 %v496, %v499
  %v520 = vrot.slane %v519, 4
  %v521 = vadd.f32 %v519, %v520
  %v522 = vrot.slane %v521, 2
  %v523 = vadd.f32 %v521, %v522
  %v524 = vrot.slane %v523, 1
  %v525 = vadd.f32 %v523, %v524
  %v526 = vmul.f32 %v496, %v496
  %v527 = vmul.f32 %v499, %v499
  %v528 = vadd.f32 %v526, %v527
  %v529 = vrot.slane %v528, 4
  %v530 = vadd.f32 %v528, %v529
  %v531 = vrot.slane %v530, 2
  %v532 = vadd.f32 %v530, %v531
  %v533 = vrot.slane %v532, 1
  %v534 = vadd.f32 %v532, %v533
  %v535 = vsel %vm95, %v525, %v534
  %536 = vmatprep.subr.mxu0 0.0
  %537 = vmatpush1.msra.mxu0 %v503
  %538 = vmatprep.subr.mxu0 0.0
  %539 = vmatpush1.msra.mxu0 %v504
  %540 = vmatprep.subr.mxu0 0.0
  %541 = vmatpush1.msra.mxu0 %v505
  %542 = vmatprep.subr.mxu0 0.0
  %543 = vmatpush1.msra.mxu0 %v506
  %544 = vmatprep.subr.mxu0 0.0
  %545 = vmatpush1.msra.mxu0 %v507
  %546 = vmatprep.subr.mxu0 0.0
  %547 = vmatpush1.msra.mxu0 %v508
  %548 = vmatprep.subr.mxu0 0.0
  %549 = vmatpush1.msra.mxu0 %v509
  %550 = vmatprep.subr.mxu0 0.0
  %551 = vmatpush1.msra.mxu0 %v510
  %552 = vmatprep.subr.mxu0 0.0
  %553 = vmatpush1.msra.mxu0 %v511
  %554 = vmatprep.subr.mxu0 0.0
  %555 = vmatpush1.msra.mxu0 %v512
  %556 = vmatprep.subr.mxu0 0.0
  %557 = vmatpush1.msra.mxu0 %v513
  %558 = vmatprep.subr.mxu0 0.0
  %559 = vmatpush1.msra.mxu0 %v514
  %560 = vmatprep.subr.mxu0 0.0
  %561 = vmatpush1.msra.mxu0 %v515
  %562 = vmatprep.subr.mxu0 0.0
  %563 = vmatpush1.msra.mxu0 %v516
  %564 = vmatprep.subr.mxu0 0.0
  %565 = vmatpush1.msra.mxu0 %v517
  %566 = vmatprep.subr.mxu0 0.0
  %567 = vmatpush1.msra.mxu0 %v518
  %568 = vmatprep.subr.mxu0 0.0
  %569 = vmatpush1.msra.mxu0 0.0
  %570 = vmatprep.subr.mxu0 0.0
  %571 = vmatpush1.msra.mxu0 0.0
  %572 = vmatprep.subr.mxu0 0.0
  %573 = vmatpush1.msra.mxu0 0.0
  %574 = vmatprep.subr.mxu0 0.0
  %575 = vmatpush1.msra.mxu0 0.0
  %576 = vmatprep.subr.mxu0 0.0
  %577 = vmatpush1.msra.mxu0 0.0
  %578 = vmatprep.subr.mxu0 0.0
  %579 = vmatpush1.msra.mxu0 0.0
  %580 = vmatprep.subr.mxu0 0.0
  %581 = vmatpush1.msra.mxu0 0.0
  %582 = vmatprep.subr.mxu0 0.0
  %583 = vmatpush1.msra.mxu0 0.0
  %584 = vmatprep.subr.mxu0 0.0
  %585 = vmatpush1.msra.mxu0 0.0
  %586 = vmatprep.subr.mxu0 0.0
  %587 = vmatpush1.msra.mxu0 0.0
  %588 = vmatprep.subr.mxu0 0.0
  %589 = vmatpush1.msra.mxu0 0.0
  %590 = vmatprep.subr.mxu0 0.0
  %591 = vmatpush1.msra.mxu0 0.0
  %592 = vmatprep.subr.mxu0 0.0
  %593 = vmatpush1.msra.mxu0 0.0
  %594 = vmatprep.subr.mxu0 0.0
  %595 = vmatpush1.msra.mxu0 0.0
  %596 = vmatprep.subr.mxu0 0.0
  %597 = vmatpush1.msra.mxu0 0.0
  %598 = vmatprep.subr.mxu0 0.0
  %599 = vmatpush1.msra.mxu0 0.0
  %600 = vmatprep.mubr.f32.mxu0 0.0
  %601 = vmatmul.mubr.f32.gmra.mrb[0].mxu0 %v535
  %v602 = vpop.f32.mrb[0].mxu0
  %v603 = vadd.f32 0.0, %v602
  %v604 = vpop.f32.mrb[0].mxu0
  %605 = vdwg.mxu0
  %v606 = vmul.f32 %v603, %v603
  %v608 = vrot.slane %v606, 7
  %v610 = vsub.f32 %v603, %v608
  %v611 = vadd.f32 %v610, 1e-05
  %v612 = vrsqrt.pop %v611
  %v614 = vrot.slane %v612, 7
  %v616 = vmul.f32 %v21, %v614
  %v617 = vlaneseq
  %v618 = vshrl.u32 %v617, 7
  %v619 = vsub.s32 0, %v618
  %v620 = vrot.slane %v603, %v619
  %v621 = vsub.f32 %v496, %v620
  %v622 = vsub.f32 %v499, %v620
  %v623 = vlaneseq
  %v624 = vshrl.u32 %v623, 7
  %v625 = vsub.s32 2, %v624
  %v626 = vrot.slane %v616, %v625
  %v627 = vmul.f32 %v621, %v626
  %v628 = vmul.f32 %v622, %v626
  %v629 = vlaneseq
  %v630 = vshrl.u32 %v629, 7
  %v631 = vsub.s32 3, %v630
  %v632 = vrot.slane %v21, %v631
  %v633 = vadd.f32 %v627, %v632
  %v634 = vadd.f32 %v628, %v632
  %v635 = vmul.f32 %v633, 0.01
  %v636 = vmul.f32 %v634, 0.01
  %v637 = vmax.f32 %v633, %v635
  %v638 = vmax.f32 %v634, %v636
  %v640 = vrot.slane %v638, 7
  %v643 = vrot.slane %v637, 7
  %v644 = vsel %vm95, %v643, %v640
  %v647 = vsel %vm95, %v640, %v643
  %v648 = vmul.f32 %v647, %v53
  %v649 = vmul.f32 %v644, %v54
  %v650 = vrot.slane %v637, 1
  %v651 = vrot.slane %v638, 1
  %v652 = vsel %vm211, %v650, %v651
  %v656 = vsel %vm211, %v651, %v650
  %v657 = vmul.f32 %v652, %v59
  %v658 = vmul.f32 %v656, %v60
  %v659 = vpack.c.bf16 %v649, %v648
  %v660 = vpack.c.bf16 %v638, %v637
  %v661 = vpack.c.bf16 %v658, %v657
  %v662 = vld [vmem:[%s4 + $0xc0] sm:$0xf]
  %v663 = vld [vmem:[%s4 + $0xc4] sm:$0xf]
  %v664 = vld [vmem:[%s4 + $0xc8] sm:$0xf]
  %v665 = vld [vmem:[%s4 + $0xcc] sm:$0xf]
  %v666 = vld [vmem:[%s4 + $0xd0] sm:$0xf]
  %v667 = vld [vmem:[%s4 + $0xd4] sm:$0xf]
  %v668 = vld [vmem:[%s4 + $0xd8] sm:$0xf]
  %v669 = vld [vmem:[%s4 + $0xdc] sm:$0xf]
  %v670 = vld [vmem:[%s4 + $0xe0] sm:$0xf]
  %v671 = vld [vmem:[%s4 + $0xe4] sm:$0xf]
  %v672 = vld [vmem:[%s4 + $0xe8] sm:$0xf]
  %v673 = vld [vmem:[%s4 + $0xec] sm:$0xf]
  %v674 = vld [vmem:[%s4 + $0xf0] sm:$0xf]
  %v675 = vld [vmem:[%s4 + $0xf4] sm:$0xf]
  %v676 = vld [vmem:[%s4 + $0xf8] sm:$0xf]
  %v677 = vld [vmem:[%s4 + $0xfc] sm:$0xf]
  %v678 = vld [vmem:[%s4 + $0x100] sm:$0xf]
  %v679 = vld [vmem:[%s4 + $0x104] sm:$0xf]
  %v680 = vld [vmem:[%s4 + $0x108] sm:$0xf]
  %v681 = vld [vmem:[%s4 + $0x10c] sm:$0xf]
  %v682 = vld [vmem:[%s4 + $0x110] sm:$0xf]
  %v683 = vld [vmem:[%s4 + $0x114] sm:$0xf]
  %v684 = vld [vmem:[%s4 + $0x118] sm:$0xf]
  %v685 = vld [vmem:[%s4 + $0x11c] sm:$0xf]
  %v686 = vld [vmem:[%s4 + $0x120] sm:$0xf]
  %v687 = vld [vmem:[%s4 + $0x124] sm:$0xf]
  %v688 = vld [vmem:[%s4 + $0x128] sm:$0xf]
  %v689 = vld [vmem:[%s4 + $0x12c] sm:$0xf]
  %v690 = vld [vmem:[%s4 + $0x130] sm:$0xf]
  %v691 = vld [vmem:[%s4 + $0x134] sm:$0xf]
  %v692 = vld [vmem:[%s4 + $0x138] sm:$0xf]
  %v693 = vld [vmem:[%s4 + $0x13c] sm:$0xf]
  %v694 = vld [vmem:[%s4 + $0x140] sm:$0xf]
  %v695 = vld [vmem:[%s4 + $0x144] sm:$0xf]
  %v696 = vld [vmem:[%s4 + $0x148] sm:$0xf]
  %v697 = vld [vmem:[%s4 + $0x14c] sm:$0xf]
  %v698 = vld [vmem:[%s4 + $0x150] sm:$0xf]
  %v699 = vld [vmem:[%s4 + $0x154] sm:$0xf]
  %v700 = vld [vmem:[%s4 + $0x158] sm:$0xf]
  %v701 = vld [vmem:[%s4 + $0x15c] sm:$0xf]
  %v702 = vld [vmem:[%s4 + $0x160] sm:$0xf]
  %v703 = vld [vmem:[%s4 + $0x164] sm:$0xf]
  %v704 = vld [vmem:[%s4 + $0x168] sm:$0xf]
  %v705 = vld [vmem:[%s4 + $0x16c] sm:$0xf]
  %v706 = vld [vmem:[%s4 + $0x170] sm:$0xf]
  %v707 = vld [vmem:[%s4 + $0x174] sm:$0xf]
  %v708 = vld [vmem:[%s4 + $0x178] sm:$0xf]
  %v709 = vld [vmem:[%s4 + $0x17c] sm:$0xf]
  %v758 = vunpack.c.l.b16 %v662
  %v759 = vunpack.c.l.b16 %v663
  %v760 = vunpack.c.l.b16 %v664
  %v761 = vunpack.c.l.b16 %v665
  %v762 = vunpack.c.l.b16 %v666
  %v763 = vunpack.c.l.b16 %v667
  %v764 = vunpack.c.l.b16 %v668
  %v765 = vunpack.c.l.b16 %v669
  %v766 = vunpack.c.l.b16 %v670
  %v767 = vunpack.c.l.b16 %v671
  %v768 = vunpack.c.l.b16 %v672
  %v769 = vunpack.c.l.b16 %v673
  %v770 = vunpack.c.l.b16 %v674
  %v771 = vunpack.c.l.b16 %v675
  %v772 = vunpack.c.l.b16 %v676
  %v773 = vunpack.c.l.b16 %v677
  %v774 = vunpack.c.l.b16 %v678
  %v775 = vunpack.c.l.b16 %v679
  %v776 = vunpack.c.l.b16 %v680
  %v777 = vunpack.c.l.b16 %v681
  %v778 = vunpack.c.l.b16 %v682
  %v779 = vunpack.c.l.b16 %v683
  %v780 = vunpack.c.l.b16 %v684
  %v781 = vunpack.c.l.b16 %v685
  %v782 = vunpack.c.l.b16 %v686
  %v783 = vunpack.c.l.b16 %v687
  %v784 = vunpack.c.l.b16 %v688
  %v785 = vunpack.c.l.b16 %v689
  %v786 = vunpack.c.l.b16 %v690
  %v787 = vunpack.c.l.b16 %v691
  %v788 = vunpack.c.l.b16 %v692
  %v789 = vunpack.c.l.b16 %v693
  %v790 = vunpack.c.l.b16 %v694
  %v791 = vunpack.c.l.b16 %v695
  %v792 = vunpack.c.l.b16 %v696
  %v793 = vunpack.c.l.b16 %v697
  %v794 = vunpack.c.l.b16 %v698
  %v795 = vunpack.c.l.b16 %v699
  %v796 = vunpack.c.l.b16 %v700
  %v797 = vunpack.c.l.b16 %v701
  %v798 = vunpack.c.l.b16 %v702
  %v799 = vunpack.c.l.b16 %v703
  %v800 = vunpack.c.l.b16 %v704
  %v801 = vunpack.c.l.b16 %v705
  %v802 = vunpack.c.l.b16 %v706
  %v803 = vunpack.c.l.b16 %v707
  %v804 = vunpack.c.l.b16 %v708
  %v805 = vunpack.c.l.b16 %v709
  %v806 = vpack.c.b16 %v759, %v758
  %v807 = vpack.c.b16 %v761, %v760
  %v808 = vpack.c.b16 %v763, %v762
  %v809 = vpack.c.b16 %v765, %v764
  %v810 = vpack.c.b16 %v767, %v766
  %v811 = vpack.c.b16 %v769, %v768
  %v812 = vpack.c.b16 %v771, %v770
  %v813 = vpack.c.b16 %v773, %v772
  %v814 = vpack.c.b16 %v775, %v774
  %v815 = vpack.c.b16 %v777, %v776
  %v816 = vpack.c.b16 %v779, %v778
  %v817 = vpack.c.b16 %v781, %v780
  %v818 = vpack.c.b16 %v783, %v782
  %v819 = vpack.c.b16 %v785, %v784
  %v820 = vpack.c.b16 %v787, %v786
  %v821 = vpack.c.b16 %v789, %v788
  %v822 = vpack.c.b16 %v791, %v790
  %v823 = vpack.c.b16 %v793, %v792
  %v824 = vpack.c.b16 %v795, %v794
  %v825 = vpack.c.b16 %v797, %v796
  %v826 = vpack.c.b16 %v799, %v798
  %v827 = vpack.c.b16 %v801, %v800
  %v828 = vpack.c.b16 %v803, %v802
  %v829 = vpack.c.b16 %v805, %v804
  %854 = vmatprep.subr.bf16.mxu0 0
  %855 = vmatpush1.bf16.msra.mxu0 %v806
  %856 = vmatprep.subr.bf16.mxu0 0
  %857 = vmatpush1.bf16.msra.mxu0 %v807
  %858 = vmatprep.subr.bf16.mxu0 0
  %859 = vmatpush1.bf16.msra.mxu0 %v808
  %860 = vmatprep.subr.bf16.mxu0 0
  %861 = vmatpush1.bf16.msra.mxu0 %v809
  %862 = vmatprep.subr.bf16.mxu0 0
  %863 = vmatpush1.bf16.msra.mxu0 %v810
  %864 = vmatprep.subr.bf16.mxu0 0
  %865 = vmatpush1.bf16.msra.mxu0 %v811
  %866 = vmatprep.subr.bf16.mxu0 0
  %867 = vmatpush1.bf16.msra.mxu0 %v812
  %868 = vmatprep.subr.bf16.mxu0 0
  %869 = vmatpush1.bf16.msra.mxu0 %v813
  %870 = vmatprep.subr.bf16.mxu0 0
  %871 = vmatpush1.bf16.msra.mxu0 %v814
  %872 = vmatprep.subr.bf16.mxu0 0
  %873 = vmatpush1.bf16.msra.mxu0 %v815
  %874 = vmatprep.subr.bf16.mxu0 0
  %875 = vmatpush1.bf16.msra.mxu0 %v816
  %876 = vmatprep.subr.bf16.mxu0 0
  %877 = vmatpush1.bf16.msra.mxu0 %v817
  %878 = vmatprep.subr.bf16.mxu0 0
  %879 = vmatpush1.bf16.msra.mxu0 %v818
  %880 = vmatprep.subr.bf16.mxu0 0
  %881 = vmatpush1.bf16.msra.mxu0 %v819
  %882 = vmatprep.subr.bf16.mxu0 0
  %883 = vmatpush1.bf16.msra.mxu0 %v820
  %884 = vmatprep.subr.bf16.mxu0 0
  %885 = vmatpush1.bf16.msra.mxu0 %v821
  %886 = vmatprep.mubr.bf16.mxu0 %v660
  %887 = vmatmul.mubr.bf16.gmra.mrb[0].mxu0 %v659
  %v888 = vpop.f32.mrb[0].mxu0
  %v889 = vadd.f32 0.0, %v888
  %v890 = vpop.f32.mrb[0].mxu0
  %v891 = vpop.f32.mrb[0].mxu0
  %v892 = vadd.f32 0.0, %v891
  %v893 = vpop.f32.mrb[0].mxu0
  %894 = vdwg.mxu0
  %895 = vmatprep.subr.bf16.mxu0 0
  %896 = vmatpush1.bf16.msra.mxu0 %v822
  %897 = vmatprep.subr.bf16.mxu0 0
  %898 = vmatpush1.bf16.msra.mxu0 %v823
  %899 = vmatprep.subr.bf16.mxu0 0
  %900 = vmatpush1.bf16.msra.mxu0 %v824
  %901 = vmatprep.subr.bf16.mxu0 0
  %902 = vmatpush1.bf16.msra.mxu0 %v825
  %903 = vmatprep.subr.bf16.mxu0 0
  %904 = vmatpush1.bf16.msra.mxu0 %v826
  %905 = vmatprep.subr.bf16.mxu0 0
  %906 = vmatpush1.bf16.msra.mxu0 %v827
  %907 = vmatprep.subr.bf16.mxu0 0
  %908 = vmatpush1.bf16.msra.mxu0 %v828
  %909 = vmatprep.subr.bf16.mxu0 0
  %910 = vmatpush1.bf16.msra.mxu0 %v829
  %911 = vmatprep.subr.bf16.mxu0 0
  %912 = vmatpush1.bf16.msra.mxu0 0
  %913 = vmatprep.subr.bf16.mxu0 0
  %914 = vmatpush1.bf16.msra.mxu0 0
  %915 = vmatprep.subr.bf16.mxu0 0
  %916 = vmatpush1.bf16.msra.mxu0 0
  %917 = vmatprep.subr.bf16.mxu0 0
  %918 = vmatpush1.bf16.msra.mxu0 0
  %919 = vmatprep.subr.bf16.mxu0 0
  %920 = vmatpush1.bf16.msra.mxu0 0
  %921 = vmatprep.subr.bf16.mxu0 0
  %922 = vmatpush1.bf16.msra.mxu0 0
  %923 = vmatprep.subr.bf16.mxu0 0
  %924 = vmatpush1.bf16.msra.mxu0 0
  %925 = vmatprep.subr.bf16.mxu0 0
  %926 = vmatpush1.bf16.msra.mxu0 0
  %927 = vmatprep.mubr.bf16.mxu0 0
  %928 = vmatmul.mubr.bf16.gmra.mrb[0].mxu0 %v661
  %v929 = vpop.f32.mrb[0].mxu0
  %v930 = vadd.f32 %v889, %v929
  %v931 = vpop.f32.mrb[0].mxu0
  %v932 = vpop.f32.mrb[0].mxu0
  %v933 = vadd.f32 %v892, %v932
  %v934 = vpop.f32.mrb[0].mxu0
  %935 = vdwg.mxu0
  %937 = vrot.lane.b32.xlu0 %v933, 64
  %v938 = vpop.permute.xlu0 %937
  %vm940 = vcmask 523264
  %v941 = vsel %vm940, %v930, %v938
  %v942 = vld [vmem:[%s1] sm:$0xff]
  %v943 = vpack.c.bf16 %v942, %v942
  %v944 = vld [vmem:[%s4 + $0x180] sm:$0xf]
  %v945 = vld [vmem:[%s4 + $0x184] sm:$0xf]
  %v946 = vld [vmem:[%s4 + $0x188] sm:$0xf]
  %v947 = vld [vmem:[%s4 + $0x18c] sm:$0xf]
  %v948 = vld [vmem:[%s4 + $0x190] sm:$0xf]
  %v949 = vld [vmem:[%s4 + $0x194] sm:$0xf]
  %v950 = vld [vmem:[%s4 + $0x198] sm:$0xf]
  %v951 = vld [vmem:[%s4 + $0x19c] sm:$0xf]
  %v960 = vunpack.c.l.b16 %v944
  %v961 = vunpack.c.l.b16 %v945
  %v962 = vunpack.c.l.b16 %v946
  %v963 = vunpack.c.l.b16 %v947
  %v964 = vunpack.c.l.b16 %v948
  %v965 = vunpack.c.l.b16 %v949
  %v966 = vunpack.c.l.b16 %v950
  %v967 = vunpack.c.l.b16 %v951
  %v968 = vpack.c.b16 %v961, %v960
  %v969 = vpack.c.b16 %v963, %v962
  %v970 = vpack.c.b16 %v965, %v964
  %v971 = vpack.c.b16 %v967, %v966
  %v977 = vsel %vm940, %v943, 0
  %979 = vmatprep.subr.bf16.mxu0 0
  %980 = vmatpush1.bf16.msra.mxu0 %v968
  %981 = vmatprep.subr.bf16.mxu0 0
  %982 = vmatpush1.bf16.msra.mxu0 %v969
  %983 = vmatprep.subr.bf16.mxu0 0
  %984 = vmatpush1.bf16.msra.mxu0 %v970
  %985 = vmatprep.subr.bf16.mxu0 0
  %986 = vmatpush1.bf16.msra.mxu0 %v971
  %987 = vmatprep.subr.bf16.mxu0 0
  %988 = vmatpush1.bf16.msra.mxu0 0
  %989 = vmatprep.subr.bf16.mxu0 0
  %990 = vmatpush1.bf16.msra.mxu0 0
  %991 = vmatprep.subr.bf16.mxu0 0
  %992 = vmatpush1.bf16.msra.mxu0 0
  %993 = vmatprep.subr.bf16.mxu0 0
  %994 = vmatpush1.bf16.msra.mxu0 0
  %995 = vmatprep.subr.bf16.mxu0 0
  %996 = vmatpush1.bf16.msra.mxu0 0
  %997 = vmatprep.subr.bf16.mxu0 0
  %998 = vmatpush1.bf16.msra.mxu0 0
  %999 = vmatprep.subr.bf16.mxu0 0
  %1000 = vmatpush1.bf16.msra.mxu0 0
  %1001 = vmatprep.subr.bf16.mxu0 0
  %1002 = vmatpush1.bf16.msra.mxu0 0
  %1003 = vmatprep.subr.bf16.mxu0 0
  %1004 = vmatpush1.bf16.msra.mxu0 0
  %1005 = vmatprep.subr.bf16.mxu0 0
  %1006 = vmatpush1.bf16.msra.mxu0 0
  %1007 = vmatprep.subr.bf16.mxu0 0
  %1008 = vmatpush1.bf16.msra.mxu0 0
  %1009 = vmatprep.subr.bf16.mxu0 0
  %1010 = vmatpush1.bf16.msra.mxu0 0
  %1011 = vmatprep.mubr.bf16.mxu0 0
  %1012 = vmatmul.mubr.bf16.gmra.mrb[0].mxu0 %v977
  %v1013 = vpop.f32.mrb[0].mxu0
  %v1014 = vadd.f32 0.0, %v1013
  %v1015 = vpop.f32.mrb[0].mxu0
  %v1016 = vpop.f32.mrb[0].mxu0
  %v1017 = vpop.f32.mrb[0].mxu0
  %1018 = vdwg.mxu0
  %v1019 = vadd.f32 %v941, %v1014
  %v1020 = vlaneseq
  %v1021 = vshrl.u32 %v1020, 7
  %v1022 = vsub.s32 5, %v1021
  %v1023 = vrot.slane %v21, %v1022
  %v1024 = vadd.f32 %v1019, %v1023
  %1025 = vst [vmem:[%s5] sm:$0xff] %v1024
  // Predicated region
  $region22: #{forward.1} parent=0 // pred_check
    _
  $region23: #{forward.1} parent=0 // pred_check_branch
    %1027 = sbr.rel (0) target = $region25
  $region24: #{forward.1} parent=0 // pred_region
    _
  $region25: #{forward.1} parent=0 // pred_fallthru
    _
  // Predicated region
  $region26: #{forward.1} parent=0 // pred_check
    _
  $region27: #{forward.1} parent=0 // pred_check_branch
    %1029 = sbr.rel (0) target = $region29
  $region28: #{forward.1} parent=0 // pred_region
    _
  $region29: #{forward.1} parent=0 // pred_fallthru
    _

</llo_original>
